<compile_context>
chip_gen: v7x
topology: tpu7x:2x2x1
jax: 0.10.0
libtpu: 0.0.40
codegen_flags: <defaults>
</compile_context>

<pallas_src>
import functools

import numpy as np

import jax
import jax.numpy as jnp
from jax.experimental import pallas as pl
from jax.experimental.pallas import tpu as pltpu


def unfold_kernel(x_ref, m_ref, o_ref, *, k, pad, w, hw_pad):
    """One grid step: C_blk channel images -> their k*k shifted/masked copies.

    x_ref: (C_blk, hw_pad)        flattened channel images (VMEM, lane-dense)
    m_ref: (k*k, hw_pad)          precomputed {0,1} border masks (constant)
    o_ref: (C_blk, k*k*hw_pad)    output; patch p at lanes [p*hw_pad, (p+1)*hw_pad)
    """
    x = x_ref[...]                                   # load once, reuse k*k times

    for p in range(k * k):
        di = p // k - pad
        dj = p % k - pad
        s = di * w + dj                              # flat source offset
        # shifted[n] = x[(n + s) % hw_pad]; wrap-around only lands on positions
        # that the border mask zeroes.
        shifted = x if s == 0 else pltpu.roll(x, (-s) % hw_pad, axis=1)
        if s == 0:
            patch = shifted                          # center patch needs no mask
        else:
            patch = shifted * m_ref[p:p + 1, :]      # one broadcast vmul / element
        # Lane-aligned, lane-dense store (hw_pad is a multiple of 128).
        o_ref[:, p * hw_pad:(p + 1) * hw_pad] = patch


def _round_up(x, m):
    return (x + m - 1) // m * m


def _choose_c_blk(bc, per_chan_out_bytes, itemsize, target_bytes=4 << 20):
    """Channels per block: ~target_bytes of output per grid step (HBM roofline)."""
    sub = max(8, 32 // max(1, itemsize))             # f32->8, bf16->16, int8->32
    target = max(1, target_bytes // max(1, per_chan_out_bytes))
    divisors = [d for d in range(1, bc + 1) if bc % d == 0]
    feasible = [d for d in divisors if d <= target] or [min(divisors)]
    # Prefer sublane-aligned channel counts (dense second-minor stores).
    cands = [d for d in feasible if d % sub == 0] or feasible
    best = max(cands)
    # Prefer an even grid length (balances v7x's 2 TensorCores), but only if it
    # does not shrink the block by more than 2x (stay near the HBM roofline).
    even = [d for d in cands if (bc // d) % 2 == 0 and 2 * d >= best]
    return max(even) if even else best
    # TODO(synk): when b*c has few divisors this can degenerate to small blocks;
    # a cdiv + padded-last-block scheme would fix that at the cost of an extra
    # wrapper-side slice copy of the output.


def _make_masks(k, pad, h, w, hw_pad, dtype):
    """Host-side constant (k*k, hw_pad) {0,1} border masks for each patch offset."""
    hw = h * w
    n = np.arange(hw_pad)
    row = n // w
    col = n % w
    in_img = n < hw
    masks = np.zeros((k * k, hw_pad), dtype=np.float32)
    for p in range(k * k):
        di = p // k - pad
        dj = p % k - pad
        valid = (in_img & (row + di >= 0) & (row + di < h)
                 & (col + dj >= 0) & (col + dj < w))
        masks[p] = valid
    return jnp.asarray(masks, dtype=dtype)


def make_unfold_weights(kernel_size=3, dtype=jnp.float32):
    """Deterministic parameters matching nn.Parameter(eye) in the module.

    The conv weights are identity, so the kernel inlines them as shifted
    copies (mathematically equivalent); returned only for fidelity.
    """
    k = kernel_size
    return jnp.eye(k * k, dtype=dtype).reshape(k * k, 1, k, k)


def unfold(x, kernel_size=3):
    b, c, h, w = x.shape
    k = kernel_size
    kk = k * k
    pad = k // 2
    hw = h * w
    hw_pad = _round_up(hw, 128)                      # lane-dense per-patch stores
    bc = b * c
    itemsize = x.dtype.itemsize

    c_blk = _choose_c_blk(bc, per_chan_out_bytes=kk * hw_pad * itemsize,
                          itemsize=itemsize)
    g = bc // c_blk

    # Flatten channel images; pad the flattened spatial dim to a lane multiple.
    x2 = x.reshape(bc, hw)
    if hw_pad != hw:
        x2 = jnp.pad(x2, ((0, 0), (0, hw_pad - hw)))
    x3 = x2.reshape(g, c_blk, hw_pad)

    masks = _make_masks(k, pad, h, w, hw_pad, x.dtype)

    # Double-buffered in + out blocks (+ the tiny constant mask); cap at 32 MiB
    # so we never over-claim scoped VMEM on v7x's 64 MiB part.
    in_block = c_blk * hw_pad * itemsize
    out_block = c_blk * kk * hw_pad * itemsize
    need = 2 * (in_block + out_block) + 2 * kk * hw_pad * itemsize
    vmem_limit = int(min(32 * 2**20, max(16 * 2**20, 2 * need)))

    out3 = pl.pallas_call(
        functools.partial(unfold_kernel, k=k, pad=pad, w=w, hw_pad=hw_pad),
        out_shape=jax.ShapeDtypeStruct((g, c_blk, kk * hw_pad), x.dtype),
        grid=(g,),
        in_specs=[
            pl.BlockSpec((None, c_blk, hw_pad), lambda i: (i, 0, 0)),
            pl.BlockSpec((kk, hw_pad), lambda i: (0, 0)),   # constant -> stays in VMEM
        ],
        out_specs=pl.BlockSpec((None, c_blk, kk * hw_pad), lambda i: (i, 0, 0)),
        compiler_params=pltpu.CompilerParams(
            dimension_semantics=("parallel",),
            vmem_limit_bytes=vmem_limit,
        ),
    )(x3, masks)

    if hw_pad == hw:
        # Free reshape: flat order (g, c_blk, p, n) == (b, c, p, n), matching torch.
        return out3.reshape(b, c * kk, hw)
    # General spatial sizes: strip the lane padding (one XLA slice copy).
    return out3.reshape(bc, kk, hw_pad)[:, :, :hw].reshape(b, c * kk, hw)


def unfold_ref(x, kernel_size=3):
    """Pure-JAX reference of F.conv2d with identity weights (for validation)."""
    b, c, h, w = x.shape
    k = kernel_size
    pad = k // 2
    xp = jnp.pad(x, ((0, 0), (0, 0), (pad, pad), (pad, pad)))
    patches = jnp.stack(
        [xp[:, :, di:di + h, dj:dj + w] for di in range(k) for dj in range(k)],
        axis=2,
    )
    return patches.reshape(b, c * k * k, h * w)


if __name__ == "__main__":
    key = jax.random.PRNGKey(0)
    b, c, h, w = 2, 4, 16, 16
    x = jax.random.normal(key, (b, c, h, w), dtype=jnp.float32)

    # Deterministic "parameters" (identity conv weights), as in the module.
    _weights = make_unfold_weights(kernel_size=3, dtype=x.dtype)

    out = jax.block_until_ready(unfold(x, kernel_size=3))

    ref = unfold_ref(x, kernel_size=3)
    assert out.shape == (b, c * 9, h * w), out.shape
    assert jnp.allclose(out, ref, atol=1e-6, rtol=1e-6), "mismatch vs reference"

    print("KERNEL_OK")
</pallas_src>

<mosaic_0001>
module attributes {stable_mosaic.version = 11 : i64} {
  func.func @unfold_kernel(%arg0: i32, %arg1: memref<1x8x256xf32, #tpu.memory_space<vmem>>, %arg2: memref<9x256xf32, #tpu.memory_space<vmem>>, %arg3: memref<1x8x2304xf32, #tpu.memory_space<vmem>>) attributes {dimension_semantics = [#tpu.dimension_semantics<parallel>], iteration_bounds = array<i64: 1>, scalar_prefetch = 0 : i64, scratch_operands = 0 : i64, tpu.core_type = #tpu.core_type<tc>, window_params = [{transform_indices = @transform_0, window_bounds = array<i64: 1, 8, 256>}, {pipeline_mode = #tpu.pipeline_mode<synchronous>, transform_indices = @transform_1, window_bounds = array<i64: 9, 256>}, {transform_indices = @transform_2, window_bounds = array<i64: 1, 8, 2304>}]} {
    %c0 = arith.constant 0 : index
    %c0_0 = arith.constant 0 : index
    %c0_1 = arith.constant 0 : index
    %0 = vector.load %arg1[%c0, %c0_0, %c0_1] : memref<1x8x256xf32, #tpu.memory_space<vmem>>, vector<1x8x256xf32>
    %1 = vector.shape_cast %0 : vector<1x8x256xf32> to vector<8x256xf32>
    %c17_i32 = arith.constant 17 : i32
    %2 = tpu.dynamic_rotate %1 by %c17_i32 dim 1 : vector<8x256xf32>, i32 -> vector<8x256xf32>
    %c0_2 = arith.constant 0 : index
    %c0_3 = arith.constant 0 : index
    %3 = vector.load %arg2[%c0_2, %c0_3] : memref<9x256xf32, #tpu.memory_space<vmem>>, vector<1x256xf32>
    %4 = vector.broadcast %3 : vector<1x256xf32> to vector<8x256xf32>
    %5 = arith.mulf %2, %4 : vector<8x256xf32>
    %c0_4 = arith.constant 0 : index
    %c0_5 = arith.constant 0 : index
    %c0_6 = arith.constant 0 : index
    %6 = vector.load %arg3[%c0_4, %c0_5, %c0_6] : memref<1x8x2304xf32, #tpu.memory_space<vmem>>, vector<1x8x256xf32>
    %7 = vector.shape_cast %6 : vector<1x8x256xf32> to vector<8x256xf32>
    %8 = vector.shape_cast %5 : vector<8x256xf32> to vector<1x8x256xf32>
    tpu.vector_store %arg3[%c0_4, %c0_5, %c0_6], %8 {strides = array<i32>} : memref<1x8x2304xf32, #tpu.memory_space<vmem>>, vector<1x8x256xf32>,
    %c16_i32 = arith.constant 16 : i32
    %9 = tpu.dynamic_rotate %1 by %c16_i32 dim 1 : vector<8x256xf32>, i32 -> vector<8x256xf32>
    %c1 = arith.constant 1 : index
    %c0_7 = arith.constant 0 : index
    %10 = vector.load %arg2[%c1, %c0_7] : memref<9x256xf32, #tpu.memory_space<vmem>>, vector<1x256xf32>
    %11 = vector.broadcast %10 : vector<1x256xf32> to vector<8x256xf32>
    %12 = arith.mulf %9, %11 : vector<8x256xf32>
    %c0_8 = arith.constant 0 : index
    %c0_9 = arith.constant 0 : index
    %c256 = arith.constant 256 : index
    %13 = vector.load %arg3[%c0_8, %c0_9, %c256] : memref<1x8x2304xf32, #tpu.memory_space<vmem>>, vector<1x8x256xf32>
    %14 = vector.shape_cast %13 : vector<1x8x256xf32> to vector<8x256xf32>
    %15 = vector.shape_cast %12 : vector<8x256xf32> to vector<1x8x256xf32>
    tpu.vector_store %arg3[%c0_8, %c0_9, %c256], %15 {strides = array<i32>} : memref<1x8x2304xf32, #tpu.memory_space<vmem>>, vector<1x8x256xf32>,
    %c15_i32 = arith.constant 15 : i32
    %16 = tpu.dynamic_rotate %1 by %c15_i32 dim 1 : vector<8x256xf32>, i32 -> vector<8x256xf32>
    %c2 = arith.constant 2 : index
    %c0_10 = arith.constant 0 : index
    %17 = vector.load %arg2[%c2, %c0_10] : memref<9x256xf32, #tpu.memory_space<vmem>>, vector<1x256xf32>
    %18 = vector.broadcast %17 : vector<1x256xf32> to vector<8x256xf32>
    %19 = arith.mulf %16, %18 : vector<8x256xf32>
    %c0_11 = arith.constant 0 : index
    %c0_12 = arith.constant 0 : index
    %c512 = arith.constant 512 : index
    %20 = vector.load %arg3[%c0_11, %c0_12, %c512] : memref<1x8x2304xf32, #tpu.memory_space<vmem>>, vector<1x8x256xf32>
    %21 = vector.shape_cast %20 : vector<1x8x256xf32> to vector<8x256xf32>
    %22 = vector.shape_cast %19 : vector<8x256xf32> to vector<1x8x256xf32>
    tpu.vector_store %arg3[%c0_11, %c0_12, %c512], %22 {strides = array<i32>} : memref<1x8x2304xf32, #tpu.memory_space<vmem>>, vector<1x8x256xf32>,
    %c1_i32 = arith.constant 1 : i32
    %23 = tpu.dynamic_rotate %1 by %c1_i32 dim 1 : vector<8x256xf32>, i32 -> vector<8x256xf32>
    %c3 = arith.constant 3 : index
    %c0_13 = arith.constant 0 : index
    %24 = vector.load %arg2[%c3, %c0_13] : memref<9x256xf32, #tpu.memory_space<vmem>>, vector<1x256xf32>
    %25 = vector.broadcast %24 : vector<1x256xf32> to vector<8x256xf32>
    %26 = arith.mulf %23, %25 : vector<8x256xf32>
    %c0_14 = arith.constant 0 : index
    %c0_15 = arith.constant 0 : index
    %c768 = arith.constant 768 : index
    %27 = vector.load %arg3[%c0_14, %c0_15, %c768] : memref<1x8x2304xf32, #tpu.memory_space<vmem>>, vector<1x8x256xf32>
    %28 = vector.shape_cast %27 : vector<1x8x256xf32> to vector<8x256xf32>
    %29 = vector.shape_cast %26 : vector<8x256xf32> to vector<1x8x256xf32>
    tpu.vector_store %arg3[%c0_14, %c0_15, %c768], %29 {strides = array<i32>} : memref<1x8x2304xf32, #tpu.memory_space<vmem>>, vector<1x8x256xf32>,
    %c0_16 = arith.constant 0 : index
    %c0_17 = arith.constant 0 : index
    %c1024 = arith.constant 1024 : index
    %30 = vector.load %arg3[%c0_16, %c0_17, %c1024] : memref<1x8x2304xf32, #tpu.memory_space<vmem>>, vector<1x8x256xf32>
    %31 = vector.shape_cast %30 : vector<1x8x256xf32> to vector<8x256xf32>
    %32 = vector.shape_cast %1 : vector<8x256xf32> to vector<1x8x256xf32>
    tpu.vector_store %arg3[%c0_16, %c0_17, %c1024], %32 {strides = array<i32>} : memref<1x8x2304xf32, #tpu.memory_space<vmem>>, vector<1x8x256xf32>,
    %c255_i32 = arith.constant 255 : i32
    %33 = tpu.dynamic_rotate %1 by %c255_i32 dim 1 : vector<8x256xf32>, i32 -> vector<8x256xf32>
    %c5 = arith.constant 5 : index
    %c0_18 = arith.constant 0 : index
    %34 = vector.load %arg2[%c5, %c0_18] : memref<9x256xf32, #tpu.memory_space<vmem>>, vector<1x256xf32>
    %35 = vector.broadcast %34 : vector<1x256xf32> to vector<8x256xf32>
    %36 = arith.mulf %33, %35 : vector<8x256xf32>
    %c0_19 = arith.constant 0 : index
    %c0_20 = arith.constant 0 : index
    %c1280 = arith.constant 1280 : index
    %37 = vector.load %arg3[%c0_19, %c0_20, %c1280] : memref<1x8x2304xf32, #tpu.memory_space<vmem>>, vector<1x8x256xf32>
    %38 = vector.shape_cast %37 : vector<1x8x256xf32> to vector<8x256xf32>
    %39 = vector.shape_cast %36 : vector<8x256xf32> to vector<1x8x256xf32>
    tpu.vector_store %arg3[%c0_19, %c0_20, %c1280], %39 {strides = array<i32>} : memref<1x8x2304xf32, #tpu.memory_space<vmem>>, vector<1x8x256xf32>,
    %c241_i32 = arith.constant 241 : i32
    %40 = tpu.dynamic_rotate %1 by %c241_i32 dim 1 : vector<8x256xf32>, i32 -> vector<8x256xf32>
    %c6 = arith.constant 6 : index
    %c0_21 = arith.constant 0 : index
    %41 = vector.load %arg2[%c6, %c0_21] : memref<9x256xf32, #tpu.memory_space<vmem>>, vector<1x256xf32>
    %42 = vector.broadcast %41 : vector<1x256xf32> to vector<8x256xf32>
    %43 = arith.mulf %40, %42 : vector<8x256xf32>
    %c0_22 = arith.constant 0 : index
    %c0_23 = arith.constant 0 : index
    %c1536 = arith.constant 1536 : index
    %44 = vector.load %arg3[%c0_22, %c0_23, %c1536] : memref<1x8x2304xf32, #tpu.memory_space<vmem>>, vector<1x8x256xf32>
    %45 = vector.shape_cast %44 : vector<1x8x256xf32> to vector<8x256xf32>
    %46 = vector.shape_cast %43 : vector<8x256xf32> to vector<1x8x256xf32>
    tpu.vector_store %arg3[%c0_22, %c0_23, %c1536], %46 {strides = array<i32>} : memref<1x8x2304xf32, #tpu.memory_space<vmem>>, vector<1x8x256xf32>,
    %c240_i32 = arith.constant 240 : i32
    %47 = tpu.dynamic_rotate %1 by %c240_i32 dim 1 : vector<8x256xf32>, i32 -> vector<8x256xf32>
    %c7 = arith.constant 7 : index
    %c0_24 = arith.constant 0 : index
    %48 = vector.load %arg2[%c7, %c0_24] : memref<9x256xf32, #tpu.memory_space<vmem>>, vector<1x256xf32>
    %49 = vector.broadcast %48 : vector<1x256xf32> to vector<8x256xf32>
    %50 = arith.mulf %47, %49 : vector<8x256xf32>
    %c0_25 = arith.constant 0 : index
    %c0_26 = arith.constant 0 : index
    %c1792 = arith.constant 1792 : index
    %51 = vector.load %arg3[%c0_25, %c0_26, %c1792] : memref<1x8x2304xf32, #tpu.memory_space<vmem>>, vector<1x8x256xf32>
    %52 = vector.shape_cast %51 : vector<1x8x256xf32> to vector<8x256xf32>
    %53 = vector.shape_cast %50 : vector<8x256xf32> to vector<1x8x256xf32>
    tpu.vector_store %arg3[%c0_25, %c0_26, %c1792], %53 {strides = array<i32>} : memref<1x8x2304xf32, #tpu.memory_space<vmem>>, vector<1x8x256xf32>,
    %c239_i32 = arith.constant 239 : i32
    %54 = tpu.dynamic_rotate %1 by %c239_i32 dim 1 : vector<8x256xf32>, i32 -> vector<8x256xf32>
    %c8 = arith.constant 8 : index
    %c0_27 = arith.constant 0 : index
    %55 = vector.load %arg2[%c8, %c0_27] : memref<9x256xf32, #tpu.memory_space<vmem>>, vector<1x256xf32>
    %56 = vector.broadcast %55 : vector<1x256xf32> to vector<8x256xf32>
    %57 = arith.mulf %54, %56 : vector<8x256xf32>
    %c0_28 = arith.constant 0 : index
    %c0_29 = arith.constant 0 : index
    %c2048 = arith.constant 2048 : index
    %58 = vector.load %arg3[%c0_28, %c0_29, %c2048] : memref<1x8x2304xf32, #tpu.memory_space<vmem>>, vector<1x8x256xf32>
    %59 = vector.shape_cast %58 : vector<1x8x256xf32> to vector<8x256xf32>
    %60 = vector.shape_cast %57 : vector<8x256xf32> to vector<1x8x256xf32>
    tpu.vector_store %arg3[%c0_28, %c0_29, %c2048], %60 {strides = array<i32>} : memref<1x8x2304xf32, #tpu.memory_space<vmem>>, vector<1x8x256xf32>,
    return
  }
  func.func @transform_0(%arg0: i32) -> (i32, i32, i32) {
    %c0_i32 = arith.constant 0 : i32
    %c0_i32_0 = arith.constant 0 : i32
    %c0_i32_1 = arith.constant 0 : i32
    return %arg0, %c0_i32, %c0_i32_0 : i32, i32, i32
  }
  func.func @transform_1(%arg0: i32) -> (i32, i32) {
    %c0_i32 = arith.constant 0 : i32
    %c0_i32_0 = arith.constant 0 : i32
    %c0_i32_1 = arith.constant 0 : i32
    return %c0_i32, %c0_i32_0 : i32, i32
  }
  func.func @transform_2(%arg0: i32) -> (i32, i32, i32) {
    %c0_i32 = arith.constant 0 : i32
    %c0_i32_0 = arith.constant 0 : i32
    %c0_i32_1 = arith.constant 0 : i32
    return %arg0, %c0_i32, %c0_i32_0 : i32, i32, i32
  }
}

</mosaic_0001>

<llo_original>
// kernel: tpu_custom_call.1
$region0: #{tpu_custom_call.1}
  #allocation0 [shape = 'u32[]', space=smem, size = 0x4, offset = 0x4, fixed_abs, tag = 'smem constant byte address 0x4 - core index']
  #allocation1 [shape = 'u32[144,128]{1,0:T(1,128)}', space=vmem, size = 0x12000, scoped, tag = 'internal scratch']
  %s0 = inlined_call_operand.hbm [shape: f32[1,8,256], index: 0, kind: input, shape index: {}]
  %s1 = inlined_call_operand.hbm [shape: f32[9,256], index: 1, kind: input, shape index: {}]
  %s2 = inlined_call_operand.hbm [shape: f32[1,8,2304], index: 2, kind: output, shape index: {}]
  %s3 = sld [smem:[#allocation0]]
  $region26: #{tpu_custom_call.1} parent=0
    _
  %s5 = ssub.s32 1, %s3
  %s6 = scalar_select 0, %s5, %s3
  $region1: #{tpu_custom_call.1} parent=0
    #allocation2 [shape = 'u8[8192]{0}', space=vmem, size = 0x2000, scoped, tag = 'input window, operand 0, single buffered']
    #allocation3 [shape = 's32[1]{0}', space=sflag, size = 0x4, scoped, tag = 'scoped memory for tpu_custom_call.1']
    #allocation4 [shape = 's32[1]{0}', space=sflag, size = 0x4, scoped, tag = 'scoped memory for tpu_custom_call.1']
    #allocation5 [shape = 'u8[16384]{0}', space=vmem, size = 0x4000, scoped, tag = 'input window, operand 1, single buffered']
    #allocation6 [shape = 's32[1]{0}', space=sflag, size = 0x4, scoped, tag = 'scoped memory for tpu_custom_call.1']
    #allocation7 [shape = 'u8[73728]{0}', space=vmem, size = 0x12000, scoped, tag = 'output window, operand 0, single buffered']
    %7 = vsyncpa [#allocation3], 0
    %8 = vsyncpa [#allocation6], 0
    %9 = vsyncpa [#allocation4], 0
    // Predicated region
    $region2: #{tpu_custom_call.1} parent=1 // pred_check
      _
    $region3: #{tpu_custom_call.1} parent=1 // pred_check_branch
      %11 = sbr.rel (0) target = $region5
    $region4: #{tpu_custom_call.1} parent=1 // pred_region
      %s13 = ssub.s32 256, 256
      %14 = vsyncadd [#allocation3], %s13
      %s16 = sshll.u32 [#allocation2], 4
      %s17 = int_to_ptr.vmem [resolvable:$true] %s16
      %19 = dma.hbm_to_vmem [thread:$0]  %s0, 256, %s17, [#allocation3]
    $region5: #{tpu_custom_call.1} parent=1 // pred_fallthru
      _
    // Predicated region
    $region6: #{tpu_custom_call.1} parent=1 // pred_check
      _
    $region7: #{tpu_custom_call.1} parent=1 // pred_check_branch
      %21 = sbr.rel (0) target = $region9
    $region8: #{tpu_custom_call.1} parent=1 // pred_region
      %s23 = ssub.s32 512, 512
      %24 = vsyncadd [#allocation6], %s23
      %s25 = sshll.u32 [#allocation5], 4
      %s26 = int_to_ptr.vmem [resolvable:$true] %s25
      %31 = dma.hbm_to_vmem [thread:$0]  %s1, 512, %s26, [#allocation6], 256, 256, 16
    $region9: #{tpu_custom_call.1} parent=1 // pred_fallthru
      _
    // Predicated region
    $region10: #{tpu_custom_call.1} parent=1 // pred_check
      _
    $region11: #{tpu_custom_call.1} parent=1 // pred_check_branch
      %33 = sbr.rel (0) target = $region13
    $region12: #{tpu_custom_call.1} parent=1 // pred_region
      %34 = dma.done [#allocation3], 256
    $region13: #{tpu_custom_call.1} parent=1 // pred_fallthru
      _
    // Predicated region
    $region14: #{tpu_custom_call.1} parent=1 // pred_check
      _
    $region15: #{tpu_custom_call.1} parent=1 // pred_check_branch
      %36 = sbr.rel (0) target = $region17
    $region16: #{tpu_custom_call.1} parent=1 // pred_region
      %37 = dma.done [#allocation6], 512
    $region17: #{tpu_custom_call.1} parent=1 // pred_fallthru
      _
    %v38 = vld [vmem:[#allocation2] sm:$0xff]
    %v39 = vld [vmem:[#allocation2 + $0x8] sm:$0xff]
    %40 = vrot.lane.b32.xlu0 %v38, 17
    %v41 = vpop.permute.xlu0 %40
    %42 = vrot.lane.b32.xlu0 %v39, 17
    %v43 = vpop.permute.xlu0 %42
    %v44 = vlaneseq
    %v45 = vand.u32 %v44, 127
    %vm46 = vcmp.lt.s32.totalorder %v45, 17
    %v47 = vsel %vm46, %v41, %v43
    %v48 = vsel %vm46, %v43, %v41
    %v49 = vld [vmem:[#allocation5] ss:$8 sm:$0x3]
    %v51 = vlaneseq
    %v52 = vshrl.u32 %v51, 7
    %v53 = vsub.s32 0, %v52
    %v54 = vrot.slane %v49, %v53
    %v55 = vlaneseq
    %v56 = vshrl.u32 %v55, 7
    %v57 = vsub.s32 1, %v56
    %v58 = vrot.slane %v49, %v57
    %v61 = vmul.f32 %v48, %v54
    %v62 = vmul.f32 %v47, %v58
    %63 = vst [vmem:[#allocation7] sm:$0xff] %v61
    %64 = vst [vmem:[#allocation7 + $0x8] sm:$0xff] %v62
    %65 = vrot.lane.b32.xlu0 %v38, 16
    %v66 = vpop.permute.xlu0 %65
    %67 = vrot.lane.b32.xlu0 %v39, 16
    %v68 = vpop.permute.xlu0 %67
    %vm69 = vcmp.lt.s32.totalorder %v45, 16
    %v70 = vsel %vm69, %v66, %v68
    %v71 = vsel %vm69, %v68, %v66
    %s72 = scalar_lea.vmem [#allocation5], 1
    %v73 = vld [vmem:[%s72] ss:$8 sm:$0x3]
    %v75 = vlaneseq
    %v76 = vshrl.u32 %v75, 7
    %v77 = vsub.s32 0, %v76
    %v78 = vrot.slane %v73, %v77
    %v79 = vlaneseq
    %v80 = vshrl.u32 %v79, 7
    %v81 = vsub.s32 1, %v80
    %v82 = vrot.slane %v73, %v81
    %v85 = vmul.f32 %v71, %v78
    %v86 = vmul.f32 %v70, %v82
    %87 = vst [vmem:[#allocation7 + $0x10] sm:$0xff] %v85
    %88 = vst [vmem:[#allocation7 + $0x18] sm:$0xff] %v86
    %89 = vrot.lane.b32.xlu0 %v38, 15
    %v90 = vpop.permute.xlu0 %89
    %91 = vrot.lane.b32.xlu0 %v39, 15
    %v92 = vpop.permute.xlu0 %91
    %vm93 = vcmp.lt.s32.totalorder %v45, 15
    %v94 = vsel %vm93, %v90, %v92
    %v95 = vsel %vm93, %v92, %v90
    %s96 = scalar_lea.vmem [#allocation5], 2
    %v97 = vld [vmem:[%s96] ss:$8 sm:$0x3]
    %v99 = vlaneseq
    %v100 = vshrl.u32 %v99, 7
    %v101 = vsub.s32 0, %v100
    %v102 = vrot.slane %v97, %v101
    %v103 = vlaneseq
    %v104 = vshrl.u32 %v103, 7
    %v105 = vsub.s32 1, %v104
    %v106 = vrot.slane %v97, %v105
    %v109 = vmul.f32 %v95, %v102
    %v110 = vmul.f32 %v94, %v106
    %111 = vst [vmem:[#allocation7 + $0x20] sm:$0xff] %v109
    %112 = vst [vmem:[#allocation7 + $0x28] sm:$0xff] %v110
    %113 = vrot.lane.b32.xlu0 %v38, 1
    %v114 = vpop.permute.xlu0 %113
    %115 = vrot.lane.b32.xlu0 %v39, 1
    %v116 = vpop.permute.xlu0 %115
    %vm117 = vcmp.lt.s32.totalorder %v45, 1
    %v118 = vsel %vm117, %v114, %v116
    %v119 = vsel %vm117, %v116, %v114
    %s120 = scalar_lea.vmem [#allocation5], 3
    %v121 = vld [vmem:[%s120] ss:$8 sm:$0x3]
    %v123 = vlaneseq
    %v124 = vshrl.u32 %v123, 7
    %v125 = vsub.s32 0, %v124
    %v126 = vrot.slane %v121, %v125
    %v127 = vlaneseq
    %v128 = vshrl.u32 %v127, 7
    %v129 = vsub.s32 1, %v128
    %v130 = vrot.slane %v121, %v129
    %v133 = vmul.f32 %v119, %v126
    %v134 = vmul.f32 %v118, %v130
    %135 = vst [vmem:[#allocation7 + $0x30] sm:$0xff] %v133
    %136 = vst [vmem:[#allocation7 + $0x38] sm:$0xff] %v134
    %137 = vst [vmem:[#allocation7 + $0x40] sm:$0xff] %v38
    %138 = vst [vmem:[#allocation7 + $0x48] sm:$0xff] %v39
    %139 = vrot.lane.b32.xlu0 %v38, 127
    %v140 = vpop.permute.xlu0 %139
    %141 = vrot.lane.b32.xlu0 %v39, 127
    %v142 = vpop.permute.xlu0 %141
    %vm143 = vcmp.lt.s32.totalorder %v45, 127
    %v144 = vsel %vm143, %v140, %v142
    %v145 = vsel %vm143, %v142, %v140
    %s146 = scalar_lea.vmem [#allocation5], 5
    %v147 = vld [vmem:[%s146] ss:$8 sm:$0x3]
    %v149 = vlaneseq
    %v150 = vshrl.u32 %v149, 7
    %v151 = vsub.s32 0, %v150
    %v152 = vrot.slane %v147, %v151
    %v153 = vlaneseq
    %v154 = vshrl.u32 %v153, 7
    %v155 = vsub.s32 1, %v154
    %v156 = vrot.slane %v147, %v155
    %v159 = vmul.f32 %v144, %v152
    %v160 = vmul.f32 %v145, %v156
    %161 = vst [vmem:[#allocation7 + $0x50] sm:$0xff] %v159
    %162 = vst [vmem:[#allocation7 + $0x58] sm:$0xff] %v160
    %163 = vrot.lane.b32.xlu0 %v38, 113
    %v164 = vpop.permute.xlu0 %163
    %165 = vrot.lane.b32.xlu0 %v39, 113
    %v166 = vpop.permute.xlu0 %165
    %vm167 = vcmp.lt.s32.totalorder %v45, 113
    %v168 = vsel %vm167, %v164, %v166
    %v169 = vsel %vm167, %v166, %v164
    %s170 = scalar_lea.vmem [#allocation5], 6
    %v171 = vld [vmem:[%s170] ss:$8 sm:$0x3]
    %v173 = vlaneseq
    %v174 = vshrl.u32 %v173, 7
    %v175 = vsub.s32 0, %v174
    %v176 = vrot.slane %v171, %v175
    %v177 = vlaneseq
    %v178 = vshrl.u32 %v177, 7
    %v179 = vsub.s32 1, %v178
    %v180 = vrot.slane %v171, %v179
    %v183 = vmul.f32 %v168, %v176
    %v184 = vmul.f32 %v169, %v180
    %185 = vst [vmem:[#allocation7 + $0x60] sm:$0xff] %v183
    %186 = vst [vmem:[#allocation7 + $0x68] sm:$0xff] %v184
    %187 = vrot.lane.b32.xlu0 %v38, 112
    %v188 = vpop.permute.xlu0 %187
    %189 = vrot.lane.b32.xlu0 %v39, 112
    %v190 = vpop.permute.xlu0 %189
    %vm191 = vcmp.lt.s32.totalorder %v45, 112
    %v192 = vsel %vm191, %v188, %v190
    %v193 = vsel %vm191, %v190, %v188
    %s194 = scalar_lea.vmem [#allocation5], 7
    %v195 = vld [vmem:[%s194] ss:$8 sm:$0x3]
    %v197 = vlaneseq
    %v198 = vshrl.u32 %v197, 7
    %v199 = vsub.s32 0, %v198
    %v200 = vrot.slane %v195, %v199
    %v201 = vlaneseq
    %v202 = vshrl.u32 %v201, 7
    %v203 = vsub.s32 1, %v202
    %v204 = vrot.slane %v195, %v203
    %v207 = vmul.f32 %v192, %v200
    %v208 = vmul.f32 %v193, %v204
    %209 = vst [vmem:[#allocation7 + $0x70] sm:$0xff] %v207
    %210 = vst [vmem:[#allocation7 + $0x78] sm:$0xff] %v208
    %211 = vrot.lane.b32.xlu0 %v38, 111
    %v212 = vpop.permute.xlu0 %211
    %213 = vrot.lane.b32.xlu0 %v39, 111
    %v214 = vpop.permute.xlu0 %213
    %vm215 = vcmp.lt.s32.totalorder %v45, 111
    %v216 = vsel %vm215, %v212, %v214
    %v217 = vsel %vm215, %v214, %v212
    %s218 = scalar_lea.vmem [#allocation5], 16
    %v219 = vld [vmem:[%s218] ss:$8 sm:$0x3]
    %v221 = vlaneseq
    %v222 = vshrl.u32 %v221, 7
    %v223 = vsub.s32 0, %v222
    %v224 = vrot.slane %v219, %v223
    %v225 = vlaneseq
    %v226 = vshrl.u32 %v225, 7
    %v227 = vsub.s32 1, %v226
    %v228 = vrot.slane %v219, %v227
    %v231 = vmul.f32 %v216, %v224
    %v232 = vmul.f32 %v217, %v228
    %233 = vst [vmem:[#allocation7 + $0x80] sm:$0xff] %v231
    %234 = vst [vmem:[#allocation7 + $0x88] sm:$0xff] %v232
    // Predicated region
    $region18: #{tpu_custom_call.1} parent=1 // pred_check
      _
    $region19: #{tpu_custom_call.1} parent=1 // pred_check_branch
      %236 = sbr.rel (0) target = $region21
    $region20: #{tpu_custom_call.1} parent=1 // pred_region
      %s238 = ssub.s32 2304, 2304
      %239 = vsyncadd [#allocation4], %s238
      %s241 = sshll.u32 [#allocation7], 4
      %s242 = int_to_ptr.vmem [resolvable:$true] %s241
      %244 = dma.vmem_to_hbm [thread:$0]  %s242, 2304, %s2, [#allocation4]
    $region21: #{tpu_custom_call.1} parent=1 // pred_fallthru
      _
    // Predicated region
    $region22: #{tpu_custom_call.1} parent=1 // pred_check
      _
    $region23: #{tpu_custom_call.1} parent=1 // pred_check_branch
      %246 = sbr.rel (0) target = $region25
    $region24: #{tpu_custom_call.1} parent=1 // pred_region
      %247 = dma.done [#allocation4], 2304
    $region25: #{tpu_custom_call.1} parent=1 // pred_fallthru
      _
    %248 = vsyncpa [#allocation3], 1
    %249 = vsyncpa [#allocation6], 1
    %250 = vsyncpa [#allocation4], 1

</llo_original>
